<compile_context>
chip_gen: v5e
topology: v5e:2x2
jax: 0.10.0
libtpu: 0.0.40
codegen_flags: <defaults>
</compile_context>

<pallas_src>
import jax
import jax.numpy as jnp
from jax.experimental import pallas as pl
from jax.experimental.pallas import tpu as pltpu


def _round_up(a, b):
    return (a + b - 1) // b * b


def _choose_tiles(rows, cols, itemsize, target_bytes, sub):
    """Pick a (row_tile, col_tile) streaming block.

    Aims for ~target_bytes of input data per block (amortizes the ~0.35 us
    per-grid-step overhead), keeps block dims (sublane-pack, 128)-aligned
    unless they equal the full array dims (always legal), and prefers >= 2
    grid cells on sizeable inputs so v7x's second TensorCore has work.
    """
    rows_s = _round_up(rows, sub)
    cols_s = _round_up(cols, 128)
    budget_elems = max(sub * 128, target_bytes // itemsize)

    # Column tile: wide enough to hit the budget even when rows is small.
    row_ref = min(rows_s, 1024)
    col_budget = max(128, (budget_elems // row_ref) // 128 * 128)
    col_tile = min(cols_s, col_budget)
    if col_tile >= cols:
        col_tile = cols  # single full-width block ("equal full dim" is legal)

    # Row tile from the remaining element budget.
    row_budget = max(sub, (budget_elems // max(col_tile, 128)) // sub * sub)
    row_tile = min(rows_s, row_budget)
    if row_tile >= rows:
        row_tile = rows

    # If everything collapsed to a single grid cell but the input is sizeable,
    # split the larger axis so both TensorCores (v7x) get work.
    if row_tile >= rows and col_tile >= cols and rows * cols * itemsize > (2 << 20):
        if cols_s >= 256:
            split = _round_up(cols_s // 2, 128)
            if split < cols:
                col_tile = split
        elif rows_s >= 2 * sub:
            split = _round_up(rows_s // 2, sub)
            if split < rows:
                row_tile = split

    return row_tile, col_tile


def _make_kernel(rows, cols, row_tile, col_tile, need_row_mask, need_col_mask):
    """Per-(i,j) partial: sum over this block of w[c]^2 * (x - y)^2."""

    def kernel(x_ref, y_ref, w2_ref, out_ref):
        d = x_ref[...].astype(jnp.float32) - y_ref[...].astype(jnp.float32)

        # Mask tail blocks only when a tail exists (static Python flags).
        # jnp.where (not multiply-by-0) so NaN/Inf garbage in the OOB region
        # of a partial block cannot propagate into the sum.
        if need_row_mask or need_col_mask:
            valid = None
            if need_row_mask:
                rid = (jax.lax.broadcasted_iota(jnp.int32, d.shape, 0)
                       + pl.program_id(0) * row_tile)
                valid = rid < rows
            if need_col_mask:
                cid = (jax.lax.broadcasted_iota(jnp.int32, d.shape, 1)
                       + pl.program_id(1) * col_tile)
                cmask = cid < cols
                valid = cmask if valid is None else jnp.logical_and(valid, cmask)
            d = jnp.where(valid, d, 0.0)

        # Lane reduce once per block (XLU has slack in this HBM-bound kernel),
        # weight each row by w^2, collapse to a scalar partial.
        row_sums = jnp.sum(d * d, axis=-1, keepdims=True)   # (row_tile, 1) f32
        partial = jnp.sum(row_sums * w2_ref[...])            # scalar f32
        out_ref[...] = jnp.broadcast_to(partial, out_ref.shape)  # lane-dense (1,8,128)

    return kernel


def scale_mse(x, y, scale_w, scale_b, *, target_block_bytes=8 * 1024 * 1024):
    """MSE(scale(x), scale(y)) == mean(scale_w[c]^2 * (x - y)^2).

    Args:
      x, y:     NCHW tensors, same shape.
      scale_w:  per-channel weight, shape (C,).
      scale_b:  per-channel bias, shape (C,). Unused: it cancels exactly.
    Returns:
      scalar float32 MSE.
    """
    del scale_b  # (w*x+b) - (w*y+b) = w*(x-y): bias cancels algebraically.
    assert x.shape == y.shape
    N, C, H, W = x.shape
    rows, cols = N * C, H * W
    total = rows * cols

    x2 = x.reshape(rows, cols)
    y2 = y.reshape(rows, cols)

    itemsize = jnp.dtype(x.dtype).itemsize
    sub = max(8, 32 // itemsize)  # sublane pack: f32 -> 8, bf16 -> 16, int8/fp8 -> 32

    row_tile, col_tile = _choose_tiles(rows, cols, itemsize, target_block_bytes, sub)
    n_rb = pl.cdiv(rows, row_tile)
    n_cb = pl.cdiv(cols, col_tile)
    need_row_mask = (rows % row_tile) != 0
    need_col_mask = (cols % col_tile) != 0

    # Per-row (N*C, 1) squared weights. Pad only this tiny column (not x/y!) so
    # a partial tail row block never reads garbage (possibly NaN) weights.
    w2 = scale_w.astype(jnp.float32) ** 2
    w2_rows = jnp.tile(w2, N).reshape(rows, 1)
    pad_rows = n_rb * row_tile - rows
    if pad_rows:
        w2_rows = jnp.pad(w2_rows, ((0, pad_rows), (0, 0)))

    kernel = _make_kernel(rows, cols, row_tile, col_tile, need_row_mask, need_col_mask)

    y_itemsize = jnp.dtype(y.dtype).itemsize
    cost = pl.CostEstimate(
        flops=3 * rows * cols + 2 * rows,
        transcendentals=0,
        bytes_accessed=(rows * cols * (itemsize + y_itemsize)
                        + (rows + pad_rows) * 4
                        + n_rb * n_cb * 8 * 128 * 4),
    )

    partials = pl.pallas_call(
        kernel,
        out_shape=jax.ShapeDtypeStruct((n_rb * n_cb, 8, 128), jnp.float32),
        grid_spec=pltpu.PrefetchScalarGridSpec(
            num_scalar_prefetch=0,
            grid=(n_rb, n_cb),
            in_specs=[
                pl.BlockSpec((row_tile, col_tile), lambda i, j: (i, j)),
                pl.BlockSpec((row_tile, col_tile), lambda i, j: (i, j)),
                pl.BlockSpec((row_tile, 1), lambda i, j: (i, 0)),
            ],
            out_specs=pl.BlockSpec((1, 8, 128), lambda i, j: (i * n_cb + j, 0, 0)),
        ),
        compiler_params=pltpu.CompilerParams(
            dimension_semantics=("parallel", "parallel"),
            vmem_limit_bytes=48 * 1024 * 1024,
        ),
        cost_estimate=cost,
    )(x2, y2, w2_rows)

    # Tiny final reduction over per-block partials in plain JAX.
    return jnp.sum(partials[:, 0, 0]) / jnp.float32(total)


if __name__ == "__main__":
    key = jax.random.PRNGKey(0)
    kx, ky = jax.random.split(key)

    # --- main check: canonical small NCHW shape --------------------------
    N, C, H, W = 2, 4, 16, 16
    x = jax.random.normal(kx, (N, C, H, W), dtype=jnp.float32)
    y = jax.random.normal(ky, (N, C, H, W), dtype=jnp.float32)
    scale_w = 1.0 + 0.1 * jnp.arange(C, dtype=jnp.float32)
    scale_b = 0.01 * jnp.arange(C, dtype=jnp.float32)

    loss = jax.block_until_ready(scale_mse(x, y, scale_w, scale_b))
    w4 = scale_w.reshape(1, C, 1, 1)
    b4 = scale_b.reshape(1, C, 1, 1)
    ref = jnp.mean(((x * w4 + b4) - (y * w4 + b4)) ** 2)
    assert jnp.allclose(loss, ref, rtol=1e-5, atol=1e-6), (loss, ref)

    # --- second check: odd shape + tiny block budget so the in-kernel
    # row/column tail-mask path (no input padding anywhere) is exercised. ---
    N2, C2, H2, W2 = 2, 20, 37, 37
    kx2, ky2 = jax.random.split(ky)
    xb = jax.random.normal(kx2, (N2, C2, H2, W2), dtype=jnp.float32)
    yb = jax.random.normal(ky2, (N2, C2, H2, W2), dtype=jnp.float32)
    wb = 1.0 + 0.05 * jnp.arange(C2, dtype=jnp.float32)
    bb = 0.02 * jnp.arange(C2, dtype=jnp.float32)

    loss2 = jax.block_until_ready(
        scale_mse(xb, yb, wb, bb, target_block_bytes=8 * 1024))
    w4b = wb.reshape(1, C2, 1, 1)
    b4b = bb.reshape(1, C2, 1, 1)
    ref2 = jnp.mean(((xb * w4b + b4b) - (yb * w4b + b4b)) ** 2)
    assert jnp.allclose(loss2, ref2, rtol=1e-4, atol=1e-6), (loss2, ref2)

    print("KERNEL_OK")
</pallas_src>

<mosaic_0001>
module attributes {stable_mosaic.version = 11 : i64} {
  func.func @kernel(%arg0: i32, %arg1: i32, %arg2: memref<8x256xf32, #tpu.memory_space<vmem>>, %arg3: memref<8x256xf32, #tpu.memory_space<vmem>>, %arg4: memref<8x1xf32, #tpu.memory_space<vmem>>, %arg5: memref<1x8x128xf32, #tpu.memory_space<vmem>>) attributes {dimension_semantics = [#tpu.dimension_semantics<parallel>, #tpu.dimension_semantics<parallel>], iteration_bounds = array<i64: 1, 1>, scalar_prefetch = 0 : i64, scratch_operands = 0 : i64, tpu.core_type = #tpu.core_type<tc>, window_params = [{transform_indices = @transform_0, window_bounds = array<i64: 8, 256>}, {transform_indices = @transform_1, window_bounds = array<i64: 8, 256>}, {transform_indices = @transform_2, window_bounds = array<i64: 8, 1>}, {transform_indices = @transform_3, window_bounds = array<i64: 1, 8, 128>}]} {
    %c0 = arith.constant 0 : index
    %c0_0 = arith.constant 0 : index
    %0 = vector.load %arg2[%c0, %c0_0] : memref<8x256xf32, #tpu.memory_space<vmem>>, vector<8x256xf32>
    %c0_1 = arith.constant 0 : index
    %c0_2 = arith.constant 0 : index
    %1 = vector.load %arg3[%c0_1, %c0_2] : memref<8x256xf32, #tpu.memory_space<vmem>>, vector<8x256xf32>
    %2 = arith.subf %0, %1 : vector<8x256xf32>
    %3 = arith.mulf %2, %2 : vector<8x256xf32>
    %cst = arith.constant dense<0.000000e+00> : vector<8xf32>
    %4 = vector.multi_reduction <add>, %3, %cst [1] : vector<8x256xf32> to vector<8xf32>
    %5 = vector.shape_cast %4 : vector<8xf32> to vector<8x1xf32>
    %c0_3 = arith.constant 0 : index
    %c0_4 = arith.constant 0 : index
    %6 = vector.load %arg4[%c0_3, %c0_4] : memref<8x1xf32, #tpu.memory_space<vmem>>, vector<8x1xf32>
    %7 = arith.mulf %5, %6 : vector<8x1xf32>
    %8 = vector.shape_cast %7 : vector<8x1xf32> to vector<1x8x1xf32>
    %cst_5 = arith.constant dense<0.000000e+00> : vector<1xf32>
    %9 = vector.multi_reduction <add>, %8, %cst_5 [1, 2] : vector<1x8x1xf32> to vector<1xf32>
    %10 = vector.shape_cast %9 : vector<1xf32> to vector<1x1x1xf32>
    %11 = vector.extract %10[0, 0, 0] : f32 from vector<1x1x1xf32>
    %12 = vector.broadcast %11 : f32 to vector<1x8x128xf32>
    %c0_6 = arith.constant 0 : index
    %c0_7 = arith.constant 0 : index
    %c0_8 = arith.constant 0 : index
    %13 = vector.load %arg5[%c0_6, %c0_7, %c0_8] : memref<1x8x128xf32, #tpu.memory_space<vmem>>, vector<1x8x128xf32>
    tpu.vector_store %arg5[%c0_6, %c0_7, %c0_8], %12 {strides = array<i32>} : memref<1x8x128xf32, #tpu.memory_space<vmem>>, vector<1x8x128xf32>,
    return
  }
  func.func @transform_0(%arg0: i32, %arg1: i32) -> (i32, i32) {
    %c0_i32 = arith.constant 0 : i32
    return %arg0, %arg1 : i32, i32
  }
  func.func @transform_1(%arg0: i32, %arg1: i32) -> (i32, i32) {
    %c0_i32 = arith.constant 0 : i32
    return %arg0, %arg1 : i32, i32
  }
  func.func @transform_2(%arg0: i32, %arg1: i32) -> (i32, i32) {
    %c0_i32 = arith.constant 0 : i32
    %c0_i32_0 = arith.constant 0 : i32
    return %arg0, %c0_i32 : i32, i32
  }
  func.func @transform_3(%arg0: i32, %arg1: i32) -> (i32, i32, i32) {
    %c1_i32 = arith.constant 1 : i32
    %0 = arith.muli %arg0, %c1_i32 : i32
    %1 = arith.addi %0, %arg1 : i32
    %c0_i32 = arith.constant 0 : i32
    %c0_i32_0 = arith.constant 0 : i32
    %c0_i32_1 = arith.constant 0 : i32
    return %1, %c0_i32, %c0_i32_0 : i32, i32, i32
  }
}

</mosaic_0001>

<llo_original>
// kernel: tpu_custom_call.1
$region0: #{tpu_custom_call.1}
  #allocation0 [shape = 'u32[]', space=smem, size = 0x4, offset = 0x4, fixed_abs, tag = 'smem constant byte address 0x4 - core index']
  #allocation1 [shape = 'u32[72,128]{1,0:T(1,128)}', space=vmem, size = 0x9000, scoped, tag = 'internal scratch']
  %s0 = inlined_call_operand.hbm [shape: f32[8,256], index: 0, kind: input, shape index: {}]
  %s1 = inlined_call_operand.hbm [shape: f32[8,256], index: 1, kind: input, shape index: {}]
  %s2 = inlined_call_operand.vmem [shape: f32[8,1], index: 2, kind: input, shape index: {}]
  %s3 = inlined_call_operand.hbm [shape: f32[1,8,128], index: 3, kind: output, shape index: {}]
  %s4 = sld [smem:[#allocation0]]
  $region30: #{tpu_custom_call.1} parent=0
    _
  %s6 = ssub.s32 1, %s4
  %s7 = scalar_select 0, %s6, %s4
  $region1: #{tpu_custom_call.1} parent=0
    #allocation2 [shape = 'u8[8192]{0}', space=vmem, size = 0x2000, scoped, tag = 'input window, operand 0, single buffered']
    #allocation3 [shape = 's32[1]{0}', space=sflag, size = 0x4, scoped, tag = 'scoped memory for tpu_custom_call.1']
    #allocation4 [shape = 's32[1]{0}', space=sflag, size = 0x4, scoped, tag = 'scoped memory for tpu_custom_call.1']
    #allocation5 [shape = 'u8[8192]{0}', space=vmem, size = 0x2000, scoped, tag = 'input window, operand 1, single buffered']
    #allocation6 [shape = 's32[1]{0}', space=sflag, size = 0x4, scoped, tag = 'scoped memory for tpu_custom_call.1']
    #allocation7 [shape = 'u8[4096]{0}', space=vmem, size = 0x1000, scoped, tag = 'output window, operand 0, single buffered']
    %8 = vsyncpa [#allocation3], 0
    %9 = vsyncpa [#allocation6], 0
    %10 = vsyncpa [#allocation4], 0
    // Predicated region
    $region2: #{tpu_custom_call.1} parent=1 // pred_check
      _
    $region3: #{tpu_custom_call.1} parent=1 // pred_check_branch
      %12 = sbr.rel (0) target = $region5
    $region4: #{tpu_custom_call.1} parent=1 // pred_region
      %14 = vsyncadd [#allocation3], 0
      %s16 = sshll.u32 %s0, 4
      %s17 = int_to_ptr.hbm [resolvable:$true] %s16
      %s18 = sshll.u32 [#allocation2], 4
      %s19 = int_to_ptr.vmem [resolvable:$true] %s18
      %21 = dma.hbm_to_vmem [thread:$0]  %s17, 256, %s19, [#allocation3]
    $region5: #{tpu_custom_call.1} parent=1 // pred_fallthru
      _
    // Predicated region
    $region6: #{tpu_custom_call.1} parent=1 // pred_check
      _
    $region7: #{tpu_custom_call.1} parent=1 // pred_check_branch
      %23 = sbr.rel (0) target = $region9
    $region8: #{tpu_custom_call.1} parent=1 // pred_region
      %25 = vsyncadd [#allocation6], 0
      %s27 = sshll.u32 %s1, 4
      %s28 = int_to_ptr.hbm [resolvable:$true] %s27
      %s29 = sshll.u32 [#allocation5], 4
      %s30 = int_to_ptr.vmem [resolvable:$true] %s29
      %32 = dma.hbm_to_vmem [thread:$0]  %s28, 256, %s30, [#allocation6]
    $region9: #{tpu_custom_call.1} parent=1 // pred_fallthru
      _
    // Predicated region
    $region10: #{tpu_custom_call.1} parent=1 // pred_check
      _
    $region11: #{tpu_custom_call.1} parent=1 // pred_check_branch
      %34 = sbr.rel (0) target = $region13
    $region12: #{tpu_custom_call.1} parent=1 // pred_region
      _
    $region13: #{tpu_custom_call.1} parent=1 // pred_fallthru
      _
    // Predicated region
    $region14: #{tpu_custom_call.1} parent=1 // pred_check
      _
    $region15: #{tpu_custom_call.1} parent=1 // pred_check_branch
      %36 = sbr.rel (0) target = $region17
    $region16: #{tpu_custom_call.1} parent=1 // pred_region
      %38 = dma.done [#allocation3], 256
    $region17: #{tpu_custom_call.1} parent=1 // pred_fallthru
      _
    // Predicated region
    $region18: #{tpu_custom_call.1} parent=1 // pred_check
      _
    $region19: #{tpu_custom_call.1} parent=1 // pred_check_branch
      %40 = sbr.rel (0) target = $region21
    $region20: #{tpu_custom_call.1} parent=1 // pred_region
      %42 = dma.done [#allocation6], 256
    $region21: #{tpu_custom_call.1} parent=1 // pred_fallthru
      _
    %s43 = sadd.s32 0, 0
    %v44 = vld [vmem:[#allocation2] sm:$0xff]
    %v45 = vld [vmem:[#allocation2 + $0x8] sm:$0xff]
    %v46 = vld [vmem:[#allocation5] sm:$0xff]
    %v47 = vld [vmem:[#allocation5 + $0x8] sm:$0xff]
    %v48 = vsub.f32 %v44, %v46
    %v49 = vsub.f32 %v45, %v47
    %v50 = vmul.f32 %v48, %v48
    %v51 = vmul.f32 %v49, %v49
    %v52 = vadd.f32 %v50, %v51
    %53 = vadd.xlane.f32.xlu0 %v52
    %v54 = vpop.xlane.xlu0 %53
    %v55 = vld [vmem:[%s2] sm:$0xff]
    %v56 = vmul.f32 %v54, %v55
    %vm57 = vcmask 7168
    %v58 = vsel %vm57, %v56, 0.0
    %59 = vadd.xlane.f32.xlu0 %v58
    %v60 = vpop.xlane.xlu0 %59
    %v61 = vrot.slane %v60, 4
    %v62 = vadd.f32 %v60, %v61
    %v63 = vrot.slane %v62, 2
    %v64 = vadd.f32 %v62, %v63
    %v65 = vrot.slane %v64, 1
    %v66 = vadd.f32 %v64, %v65
    %s67 = vtos %v66
    %v68 = vstv %s67
    %69 = vst [vmem:[#allocation7] sm:$0xff] %v68
    // Predicated region
    $region22: #{tpu_custom_call.1} parent=1 // pred_check
      _
    $region23: #{tpu_custom_call.1} parent=1 // pred_check_branch
      %71 = sbr.rel (0) target = $region25
    $region24: #{tpu_custom_call.1} parent=1 // pred_region
      %s72 = sadd.s32 0, 0
      %74 = vsyncadd [#allocation4], 0
      %s75 = smul.addr %s72, 8
      %s76 = scalar_lea.hbm %s3, %s75
      %s78 = sshll.u32 [#allocation7], 4
      %s79 = int_to_ptr.vmem [resolvable:$true] %s78
      %s80 = sshll.u32 %s76, 4
      %s81 = int_to_ptr.hbm [resolvable:$true] %s80
      %83 = dma.vmem_to_hbm [thread:$0]  %s79, 128, %s81, [#allocation4]
    $region25: #{tpu_custom_call.1} parent=1 // pred_fallthru
      _
    // Predicated region
    $region26: #{tpu_custom_call.1} parent=1 // pred_check
      _
    $region27: #{tpu_custom_call.1} parent=1 // pred_check_branch
      %85 = sbr.rel (0) target = $region29
    $region28: #{tpu_custom_call.1} parent=1 // pred_region
      %87 = dma.done [#allocation4], 128
    $region29: #{tpu_custom_call.1} parent=1 // pred_fallthru
      _
    %88 = vsyncpa [#allocation3], 1
    %89 = vsyncpa [#allocation6], 1
    %90 = vsyncpa [#allocation4], 1

</llo_original>
